<compile_context>
chip_gen: v7x
topology: tpu7x:2x2x1
jax: 0.10.0
libtpu: 0.0.40
codegen_flags: <defaults>
</compile_context>

<pallas_src>
import functools

import jax
import jax.numpy as jnp
from jax import lax
from jax.experimental import pallas as pl
from jax.experimental.pallas import tpu as pltpu

LOG2 = 0.6931471805599453  # ShiftedSoftplus shift = log(2)
LANE = 128
SUBLANE = 8


def _round_up(x, m):
    return (x + m - 1) // m * m


def _softplus(x):
    # single-exp numerically-stable softplus (one EUP exp + one log1p per elem)
    return jnp.maximum(x, 0.0) + jnp.log1p(jnp.exp(-jnp.abs(x)))


# ---------------------------------------------------------------- fused kernel


def _fused_kernel(x_ref, batch_ref, waug_ref,
                  w1_ref, b1_ref, w2_ref, b2_ref, w3_ref, b3_ref,
                  o_ref, acc_ref, *, g_pad, cnt_col):
    """Streams node tiles: embed+indicator+count via one matmul, segment-sum
    into a resident [g_pad, F_pad] accumulator, run the head on the last tile."""
    k = pl.program_id(0)

    @pl.when(k == 0)
    def _():
        acc_ref[...] = jnp.zeros_like(acc_ref)

    # [tile, Kin_pad] @ [Kin_pad, F_pad] -> [tile, F_pad]
    # columns: [pos | emb | node_indicator | count | zero padding]
    feat = jnp.dot(x_ref[...], waug_ref[...], preferred_element_type=jnp.float32)

    # per-graph sum: one-hot built in-register (never materialised in HBM)
    tile = x_ref.shape[0]
    gids = lax.broadcasted_iota(jnp.int32, (g_pad, tile), 0)
    onehot = (gids == batch_ref[...]).astype(jnp.float32)        # [g_pad, tile]
    acc_ref[...] += jnp.dot(onehot, feat, preferred_element_type=jnp.float32)

    @pl.when(k == pl.num_programs(0) - 1)
    def _():
        sums = acc_ref[...]                                      # [g_pad, F_pad]
        counts = sums[:, cnt_col:cnt_col + 1]                    # nodes per graph
        inv = pl.reciprocal(jnp.maximum(counts, 1.0), approx=True)
        pooled = sums * inv                                      # global_mean_pool
        # head: Linear -> ShiftedSoftplus -> Linear -> ShiftedSoftplus -> Linear
        h1 = _softplus(jnp.dot(pooled, w1_ref[...],
                               preferred_element_type=jnp.float32) + b1_ref[...]) - LOG2
        h2 = _softplus(jnp.dot(h1, w2_ref[...],
                               preferred_element_type=jnp.float32) + b2_ref[...]) - LOG2
        o_ref[...] = jnp.dot(h2, w3_ref[...],
                             preferred_element_type=jnp.float32) + b3_ref[...]


# ---------------------------------------------------------------- model wrapper


def init_params(key, protein_feat_dim, ligand_feat_dim, hidden_dim,
                num_ffn_head, node_indicator=True, ignore_pos=False):
    emb_dim = hidden_dim - 1 if node_indicator else hidden_dim
    pre_head_dim = hidden_dim if ignore_pos else hidden_dim + 3
    ks = jax.random.split(key, 5)
    s = 0.1
    return {
        "Wp": s * jax.random.normal(ks[0], (protein_feat_dim, emb_dim), jnp.float32),
        "bp": jnp.zeros((emb_dim,), jnp.float32),
        "Wl": s * jax.random.normal(ks[1], (ligand_feat_dim, emb_dim), jnp.float32),
        "bl": jnp.zeros((emb_dim,), jnp.float32),
        "W1": s * jax.random.normal(ks[2], (pre_head_dim, num_ffn_head), jnp.float32),
        "b1": jnp.zeros((num_ffn_head,), jnp.float32),
        "W2": s * jax.random.normal(ks[3], (num_ffn_head, hidden_dim), jnp.float32),
        "b2": jnp.zeros((hidden_dim,), jnp.float32),
        "W3": s * jax.random.normal(ks[4], (hidden_dim, 1), jnp.float32),
        "b3": jnp.zeros((1,), jnp.float32),
    }


def classifier_forward(params, protein_pos, protein_v, batch_protein,
                       ligand_pos, ligand_v, batch_ligand, num_graphs,
                       node_indicator=True, ignore_pos=False):
    kp = params["Wp"].shape[0]
    kl = params["Wl"].shape[0]
    emb = params["Wp"].shape[1]
    ffn = params["W1"].shape[1]
    hid = params["W2"].shape[1]

    npos = 0 if ignore_pos else 3
    ind = 1 if node_indicator else 0
    pre_head = npos + emb + ind            # == head input dim (hidden[+3])
    cnt_col = pre_head                     # extra column holding per-node 1.0
    f_pad = _round_up(pre_head + 1, LANE)  # lane-dense feature slab
    out_pad = LANE                         # lane-dense output (pred in col 0)

    kin = npos + kp + kl + 2               # pos | prot feats | lig feats | sel_p | sel_l
    kin_pad = _round_up(kin, 32)

    # ---- fused embedding weight: block-diagonal + identity-for-pos + biases ----
    w_aug = jnp.zeros((kin_pad, f_pad), jnp.float32)
    r = 0
    if npos:
        w_aug = w_aug.at[r:r + 3, 0:3].set(jnp.eye(3, dtype=jnp.float32))
        r += 3
    w_aug = w_aug.at[r:r + kp, npos:npos + emb].set(params["Wp"]); r += kp
    w_aug = w_aug.at[r:r + kl, npos:npos + emb].set(params["Wl"]); r += kl
    sel_p, sel_l = r, r + 1
    w_aug = w_aug.at[sel_p, npos:npos + emb].set(params["bp"])
    w_aug = w_aug.at[sel_l, npos:npos + emb].set(params["bl"])
    if ind:
        w_aug = w_aug.at[sel_l, npos + emb].set(1.0)   # node_indicator: 1 for ligand
    w_aug = w_aug.at[sel_p, cnt_col].set(1.0)          # count column
    w_aug = w_aug.at[sel_l, cnt_col].set(1.0)

    # ---- augmented node-feature slab (protein rows then ligand rows) ----------
    n_p, n_l = protein_v.shape[0], ligand_v.shape[0]
    n = n_p + n_l
    tile = min(1024, _round_up(n, SUBLANE))
    n_pad = _round_up(n, tile)

    x_aug = jnp.zeros((n_pad, kin_pad), jnp.float32)
    if npos:
        x_aug = x_aug.at[:n_p, 0:3].set(protein_pos.astype(jnp.float32))
        x_aug = x_aug.at[n_p:n, 0:3].set(ligand_pos.astype(jnp.float32))
    x_aug = x_aug.at[:n_p, npos:npos + kp].set(protein_v.astype(jnp.float32))
    x_aug = x_aug.at[n_p:n, npos + kp:npos + kp + kl].set(ligand_v.astype(jnp.float32))
    x_aug = x_aug.at[:n_p, sel_p].set(1.0)
    x_aug = x_aug.at[n_p:n, sel_l].set(1.0)

    # batch ids along lanes; padding rows get -1 so they match no graph
    batch_all = jnp.full((1, n_pad), -1, jnp.int32)
    batch_all = batch_all.at[0, :n_p].set(batch_protein.astype(jnp.int32))
    batch_all = batch_all.at[0, n_p:n].set(batch_ligand.astype(jnp.int32))

    # NOTE: compose_context's sort is skipped on purpose — mean pooling is
    # permutation invariant and refine_net is an identity (TODO above).

    # ---- head weights, padded to the lane-dense slab layout -------------------
    g_pad = _round_up(max(int(num_graphs), 1), SUBLANE)
    w1 = jnp.zeros((f_pad, ffn), jnp.float32).at[:pre_head, :].set(params["W1"])
    b1 = params["b1"].reshape(1, ffn)
    w2 = params["W2"]
    b2 = params["b2"].reshape(1, hid)
    w3 = jnp.zeros((hid, out_pad), jnp.float32).at[:, 0:1].set(params["W3"])
    b3 = jnp.zeros((1, out_pad), jnp.float32).at[0, 0].set(params["b3"][0])

    kernel = functools.partial(_fused_kernel, g_pad=g_pad, cnt_col=cnt_col)
    out = pl.pallas_call(
        kernel,
        out_shape=jax.ShapeDtypeStruct((g_pad, out_pad), jnp.float32),
        grid_spec=pltpu.PrefetchScalarGridSpec(
            num_scalar_prefetch=0,
            grid=(n_pad // tile,),
            in_specs=[
                pl.BlockSpec((tile, kin_pad), lambda i: (i, 0)),    # node tiles (streamed)
                pl.BlockSpec((1, tile), lambda i: (0, i)),          # batch ids (streamed)
                pl.BlockSpec((kin_pad, f_pad), lambda i: (0, 0)),   # resident weights ↓
                pl.BlockSpec((f_pad, ffn), lambda i: (0, 0)),
                pl.BlockSpec((1, ffn), lambda i: (0, 0)),
                pl.BlockSpec((ffn, hid), lambda i: (0, 0)),
                pl.BlockSpec((1, hid), lambda i: (0, 0)),
                pl.BlockSpec((hid, out_pad), lambda i: (0, 0)),
                pl.BlockSpec((1, out_pad), lambda i: (0, 0)),
            ],
            out_specs=pl.BlockSpec((g_pad, out_pad), lambda i: (0, 0)),
            scratch_shapes=[pltpu.VMEM((g_pad, f_pad), jnp.float32)],
        ),
        compiler_params=pltpu.CompilerParams(
            dimension_semantics=("arbitrary",),        # reduction over node tiles
            vmem_limit_bytes=32 * 1024 * 1024,
        ),
    )(x_aug, batch_all, w_aug, w1, b1, w2, b2, w3, b3)

    return out[:num_graphs, 0:1]


# ---------------------------------------------------------------- demo

if __name__ == "__main__":
    key = jax.random.PRNGKey(0)

    hidden_dim = 32
    num_ffn_head = 64
    protein_feat_dim = 16
    ligand_feat_dim = 8     # == num_classes
    num_graphs = 2
    n_protein = 12          # 6 protein atoms per graph
    n_ligand = 6            # 3 ligand atoms per graph

    kpp, kpv, klp, klv, kparam = jax.random.split(key, 5)
    protein_pos = jax.random.normal(kpp, (n_protein, 3), jnp.float32)
    protein_v = jax.random.normal(kpv, (n_protein, protein_feat_dim), jnp.float32)
    batch_protein = jnp.repeat(jnp.arange(num_graphs, dtype=jnp.int32),
                               n_protein // num_graphs)
    ligand_pos = jax.random.normal(klp, (n_ligand, 3), jnp.float32)
    ligand_types = jax.random.randint(klv, (n_ligand,), 0, ligand_feat_dim)
    ligand_v = jax.nn.one_hot(ligand_types, ligand_feat_dim, dtype=jnp.float32)
    batch_ligand = jnp.repeat(jnp.arange(num_graphs, dtype=jnp.int32),
                              n_ligand // num_graphs)

    params = init_params(kparam, protein_feat_dim, ligand_feat_dim,
                         hidden_dim, num_ffn_head,
                         node_indicator=True, ignore_pos=False)

    pred = classifier_forward(params, protein_pos, protein_v, batch_protein,
                              ligand_pos, ligand_v, batch_ligand, num_graphs,
                              node_indicator=True, ignore_pos=False)
    pred = jax.block_until_ready(pred)
    assert pred.shape == (num_graphs, 1)
    assert bool(jnp.all(jnp.isfinite(pred)))
    print("KERNEL_OK")
</pallas_src>

<mosaic_0001>
module attributes {stable_mosaic.version = 11 : i64} {
  func.func @_fused_kernel(%arg0: i32, %arg1: memref<24x32xf32, #tpu.memory_space<vmem>>, %arg2: memref<1x24xi32, #tpu.memory_space<vmem>>, %arg3: memref<32x128xf32, #tpu.memory_space<vmem>>, %arg4: memref<128x64xf32, #tpu.memory_space<vmem>>, %arg5: memref<1x64xf32, #tpu.memory_space<vmem>>, %arg6: memref<64x32xf32, #tpu.memory_space<vmem>>, %arg7: memref<1x32xf32, #tpu.memory_space<vmem>>, %arg8: memref<32x128xf32, #tpu.memory_space<vmem>>, %arg9: memref<1x128xf32, #tpu.memory_space<vmem>>, %arg10: memref<8x128xf32, #tpu.memory_space<vmem>>, %arg11: memref<8x128xf32, #tpu.memory_space<vmem>>) attributes {dimension_semantics = [#tpu.dimension_semantics<arbitrary>], iteration_bounds = array<i64: 1>, scalar_prefetch = 0 : i64, scratch_operands = 1 : i64, tpu.core_type = #tpu.core_type<tc>, window_params = [{transform_indices = @transform_0, window_bounds = array<i64: 24, 32>}, {transform_indices = @transform_1, window_bounds = array<i64: 1, 24>}, {pipeline_mode = #tpu.pipeline_mode<synchronous>, transform_indices = @transform_2, window_bounds = array<i64: 32, 128>}, {pipeline_mode = #tpu.pipeline_mode<synchronous>, transform_indices = @transform_3, window_bounds = array<i64: 128, 64>}, {pipeline_mode = #tpu.pipeline_mode<synchronous>, transform_indices = @transform_4, window_bounds = array<i64: 1, 64>}, {pipeline_mode = #tpu.pipeline_mode<synchronous>, transform_indices = @transform_5, window_bounds = array<i64: 64, 32>}, {pipeline_mode = #tpu.pipeline_mode<synchronous>, transform_indices = @transform_6, window_bounds = array<i64: 1, 32>}, {pipeline_mode = #tpu.pipeline_mode<synchronous>, transform_indices = @transform_7, window_bounds = array<i64: 32, 128>}, {pipeline_mode = #tpu.pipeline_mode<synchronous>, transform_indices = @transform_8, window_bounds = array<i64: 1, 128>}, {pipeline_mode = #tpu.pipeline_mode<synchronous>, transform_indices = @transform_9, window_bounds = array<i64: 8, 128>}]} {
    %c0_i32 = arith.constant 0 : i32
    %0 = arith.cmpi eq, %arg0, %c0_i32 : i32
    %1 = arith.extui %0 : i1 to i32
    %c0_i32_0 = arith.constant 0 : i32
    %2 = arith.cmpi ne, %1, %c0_i32_0 : i32
    scf.if %2 {
      %cst_13 = arith.constant 0.000000e+00 : f32
      %19 = vector.broadcast %cst_13 : f32 to vector<8x128xf32>
      %c0_14 = arith.constant 0 : index
      %c0_15 = arith.constant 0 : index
      %20 = vector.load %arg11[%c0_14, %c0_15] : memref<8x128xf32, #tpu.memory_space<vmem>>, vector<8x128xf32>
      tpu.vector_store %arg11[%c0_14, %c0_15], %19 {strides = array<i32>} : memref<8x128xf32, #tpu.memory_space<vmem>>, vector<8x128xf32>,
    } else {
    }
    %c0 = arith.constant 0 : index
    %c0_1 = arith.constant 0 : index
    %3 = vector.load %arg1[%c0, %c0_1] : memref<24x32xf32, #tpu.memory_space<vmem>>, vector<24x32xf32>
    %c0_2 = arith.constant 0 : index
    %c0_3 = arith.constant 0 : index
    %4 = vector.load %arg3[%c0_2, %c0_3] : memref<32x128xf32, #tpu.memory_space<vmem>>, vector<32x128xf32>
    %cst = arith.constant dense<0.000000e+00> : vector<24x128xf32>
    %5 = tpu.matmul %3, %4, %cst {dimension_numbers = #tpu.dot_dimension_numbers<[1], [0], [0], [1], [0, 0, 1, 1], [], []>} : vector<24x32xf32>, vector<32x128xf32>, vector<24x128xf32> -> vector<24x128xf32>
    %6 = tpu.iota {dimensions = array<i32: 0>} : vector<8x24xi32>
    %c0_4 = arith.constant 0 : index
    %c0_5 = arith.constant 0 : index
    %7 = vector.load %arg2[%c0_4, %c0_5] : memref<1x24xi32, #tpu.memory_space<vmem>>, vector<1x24xi32>
    %8 = vector.broadcast %7 : vector<1x24xi32> to vector<8x24xi32>
    %9 = arith.cmpi eq, %6, %8 : vector<8x24xi32>
    %10 = arith.extui %9 : vector<8x24xi1> to vector<8x24xi32>
    %11 = arith.sitofp %10 : vector<8x24xi32> to vector<8x24xf32>
    %c0_6 = arith.constant 0 : index
    %c0_7 = arith.constant 0 : index
    %12 = vector.load %arg11[%c0_6, %c0_7] : memref<8x128xf32, #tpu.memory_space<vmem>>, vector<8x128xf32>
    %cst_8 = arith.constant dense<0.000000e+00> : vector<8x128xf32>
    %13 = tpu.matmul %11, %5, %cst_8 {dimension_numbers = #tpu.dot_dimension_numbers<[1], [0], [0], [1], [0, 0, 1, 1], [], []>} : vector<8x24xf32>, vector<24x128xf32>, vector<8x128xf32> -> vector<8x128xf32>
    %14 = arith.addf %12, %13 : vector<8x128xf32>
    %c0_9 = arith.constant 0 : index
    %c0_10 = arith.constant 0 : index
    %15 = vector.load %arg11[%c0_9, %c0_10] : memref<8x128xf32, #tpu.memory_space<vmem>>, vector<8x128xf32>
    tpu.vector_store %arg11[%c0_9, %c0_10], %14 {strides = array<i32>} : memref<8x128xf32, #tpu.memory_space<vmem>>, vector<8x128xf32>,
    %c0_i32_11 = arith.constant 0 : i32
    %16 = arith.cmpi eq, %arg0, %c0_i32_11 : i32
    %17 = arith.extui %16 : i1 to i32
    %c0_i32_12 = arith.constant 0 : i32
    %18 = arith.cmpi ne, %17, %c0_i32_12 : i32
    scf.if %18 {
      %c0_13 = arith.constant 0 : index
      %c0_14 = arith.constant 0 : index
      %19 = vector.load %arg11[%c0_13, %c0_14] : memref<8x128xf32, #tpu.memory_space<vmem>>, vector<8x128xf32>
      %20 = vector.extract_strided_slice %19 {offsets = [0, 35], sizes = [8, 1], strides = [1, 1]} : vector<8x128xf32> to vector<8x1xf32>
      %cst_15 = arith.constant 1.000000e+00 : f32
      %21 = vector.broadcast %cst_15 : f32 to vector<8x1xf32>
      %22 = arith.maximumf %20, %21 : vector<8x1xf32>
      %23 = tpu.reciprocal %22 {approx = true} : vector<8x1xf32> -> vector<8x1xf32>
      %24 = vector.broadcast %23 : vector<8x1xf32> to vector<8x128xf32>
      %25 = arith.mulf %19, %24 : vector<8x128xf32>
      %c0_16 = arith.constant 0 : index
      %c0_17 = arith.constant 0 : index
      %26 = vector.load %arg4[%c0_16, %c0_17] : memref<128x64xf32, #tpu.memory_space<vmem>>, vector<128x64xf32>
      %cst_18 = arith.constant dense<0.000000e+00> : vector<8x64xf32>
      %27 = tpu.matmul %25, %26, %cst_18 {dimension_numbers = #tpu.dot_dimension_numbers<[1], [0], [0], [1], [0, 0, 1, 1], [], []>} : vector<8x128xf32>, vector<128x64xf32>, vector<8x64xf32> -> vector<8x64xf32>
      %c0_19 = arith.constant 0 : index
      %c0_20 = arith.constant 0 : index
      %28 = vector.load %arg5[%c0_19, %c0_20] : memref<1x64xf32, #tpu.memory_space<vmem>>, vector<1x64xf32>
      %29 = vector.broadcast %28 : vector<1x64xf32> to vector<8x64xf32>
      %30 = arith.addf %27, %29 : vector<8x64xf32>
      %cst_21 = arith.constant 0.000000e+00 : f32
      %31 = vector.broadcast %cst_21 : f32 to vector<8x64xf32>
      %32 = arith.maximumf %30, %31 : vector<8x64xf32>
      %33 = math.absf %30 : vector<8x64xf32>
      %cst_22 = arith.constant 0.000000e+00 : f32
      %34 = vector.broadcast %cst_22 : f32 to vector<8x64xf32>
      %35 = arith.subf %34, %33 : vector<8x64xf32>
      %36 = math.exp %35 : vector<8x64xf32>
      %37 = math.log1p %36 : vector<8x64xf32>
      %38 = arith.addf %32, %37 : vector<8x64xf32>
      %cst_23 = arith.constant 0.693147182 : f32
      %39 = vector.broadcast %cst_23 : f32 to vector<8x64xf32>
      %40 = arith.subf %38, %39 : vector<8x64xf32>
      %c0_24 = arith.constant 0 : index
      %c0_25 = arith.constant 0 : index
      %41 = vector.load %arg6[%c0_24, %c0_25] : memref<64x32xf32, #tpu.memory_space<vmem>>, vector<64x32xf32>
      %cst_26 = arith.constant dense<0.000000e+00> : vector<8x32xf32>
      %42 = tpu.matmul %40, %41, %cst_26 {dimension_numbers = #tpu.dot_dimension_numbers<[1], [0], [0], [1], [0, 0, 1, 1], [], []>} : vector<8x64xf32>, vector<64x32xf32>, vector<8x32xf32> -> vector<8x32xf32>
      %c0_27 = arith.constant 0 : index
      %c0_28 = arith.constant 0 : index
      %43 = vector.load %arg7[%c0_27, %c0_28] : memref<1x32xf32, #tpu.memory_space<vmem>>, vector<1x32xf32>
      %44 = vector.broadcast %43 : vector<1x32xf32> to vector<8x32xf32>
      %45 = arith.addf %42, %44 : vector<8x32xf32>
      %cst_29 = arith.constant 0.000000e+00 : f32
      %46 = vector.broadcast %cst_29 : f32 to vector<8x32xf32>
      %47 = arith.maximumf %45, %46 : vector<8x32xf32>
      %48 = math.absf %45 : vector<8x32xf32>
      %cst_30 = arith.constant 0.000000e+00 : f32
      %49 = vector.broadcast %cst_30 : f32 to vector<8x32xf32>
      %50 = arith.subf %49, %48 : vector<8x32xf32>
      %51 = math.exp %50 : vector<8x32xf32>
      %52 = math.log1p %51 : vector<8x32xf32>
      %53 = arith.addf %47, %52 : vector<8x32xf32>
      %cst_31 = arith.constant 0.693147182 : f32
      %54 = vector.broadcast %cst_31 : f32 to vector<8x32xf32>
      %55 = arith.subf %53, %54 : vector<8x32xf32>
      %c0_32 = arith.constant 0 : index
      %c0_33 = arith.constant 0 : index
      %56 = vector.load %arg8[%c0_32, %c0_33] : memref<32x128xf32, #tpu.memory_space<vmem>>, vector<32x128xf32>
      %cst_34 = arith.constant dense<0.000000e+00> : vector<8x128xf32>
      %57 = tpu.matmul %55, %56, %cst_34 {dimension_numbers = #tpu.dot_dimension_numbers<[1], [0], [0], [1], [0, 0, 1, 1], [], []>} : vector<8x32xf32>, vector<32x128xf32>, vector<8x128xf32> -> vector<8x128xf32>
      %c0_35 = arith.constant 0 : index
      %c0_36 = arith.constant 0 : index
      %58 = vector.load %arg9[%c0_35, %c0_36] : memref<1x128xf32, #tpu.memory_space<vmem>>, vector<1x128xf32>
      %59 = vector.broadcast %58 : vector<1x128xf32> to vector<8x128xf32>
      %60 = arith.addf %57, %59 : vector<8x128xf32>
      %c0_37 = arith.constant 0 : index
      %c0_38 = arith.constant 0 : index
      %61 = vector.load %arg10[%c0_37, %c0_38] : memref<8x128xf32, #tpu.memory_space<vmem>>, vector<8x128xf32>
      tpu.vector_store %arg10[%c0_37, %c0_38], %60 {strides = array<i32>} : memref<8x128xf32, #tpu.memory_space<vmem>>, vector<8x128xf32>,
    } else {
    }
    return
  }
  func.func @transform_0(%arg0: i32) -> (i32, i32) {
    %c0_i32 = arith.constant 0 : i32
    %c0_i32_0 = arith.constant 0 : i32
    return %arg0, %c0_i32 : i32, i32
  }
  func.func @transform_1(%arg0: i32) -> (i32, i32) {
    %c0_i32 = arith.constant 0 : i32
    %c0_i32_0 = arith.constant 0 : i32
    return %c0_i32, %arg0 : i32, i32
  }
  func.func @transform_2(%arg0: i32) -> (i32, i32) {
    %c0_i32 = arith.constant 0 : i32
    %c0_i32_0 = arith.constant 0 : i32
    %c0_i32_1 = arith.constant 0 : i32
    return %c0_i32, %c0_i32_0 : i32, i32
  }
  func.func @transform_3(%arg0: i32) -> (i32, i32) {
    %c0_i32 = arith.constant 0 : i32
    %c0_i32_0 = arith.constant 0 : i32
    %c0_i32_1 = arith.constant 0 : i32
    return %c0_i32, %c0_i32_0 : i32, i32
  }
  func.func @transform_4(%arg0: i32) -> (i32, i32) {
    %c0_i32 = arith.constant 0 : i32
    %c0_i32_0 = arith.constant 0 : i32
    %c0_i32_1 = arith.constant 0 : i32
    return %c0_i32, %c0_i32_0 : i32, i32
  }
  func.func @transform_5(%arg0: i32) -> (i32, i32) {
    %c0_i32 = arith.constant 0 : i32
    %c0_i32_0 = arith.constant 0 : i32
    %c0_i32_1 = arith.constant 0 : i32
    return %c0_i32, %c0_i32_0 : i32, i32
  }
  func.func @transform_6(%arg0: i32) -> (i32, i32) {
    %c0_i32 = arith.constant 0 : i32
    %c0_i32_0 = arith.constant 0 : i32
    %c0_i32_1 = arith.constant 0 : i32
    return %c0_i32, %c0_i32_0 : i32, i32
  }
  func.func @transform_7(%arg0: i32) -> (i32, i32) {
    %c0_i32 = arith.constant 0 : i32
    %c0_i32_0 = arith.constant 0 : i32
    %c0_i32_1 = arith.constant 0 : i32
    return %c0_i32, %c0_i32_0 : i32, i32
  }
  func.func @transform_8(%arg0: i32) -> (i32, i32) {
    %c0_i32 = arith.constant 0 : i32
    %c0_i32_0 = arith.constant 0 : i32
    %c0_i32_1 = arith.constant 0 : i32
    return %c0_i32, %c0_i32_0 : i32, i32
  }
  func.func @transform_9(%arg0: i32) -> (i32, i32) {
    %c0_i32 = arith.constant 0 : i32
    %c0_i32_0 = arith.constant 0 : i32
    %c0_i32_1 = arith.constant 0 : i32
    return %c0_i32, %c0_i32_0 : i32, i32
  }
}

</mosaic_0001>

<llo_original>
// kernel: tpu_custom_call.1
$region0: #{tpu_custom_call.1}
  #allocation0 [shape = 'u32[]', space=smem, size = 0x4, offset = 0x4, fixed_abs, tag = 'smem constant byte address 0x4 - core index']
  #allocation1 [shape = 'u32[144,128]{1,0:T(1,128)}', space=vmem, size = 0x12000, scoped, tag = 'internal scratch']
  #allocation2 [shape = 'f32[8,128]{1,0:T(8,128)}', space=vmem, size = 0x1000, scoped, tag = 'scratch operand']
  %s0 = inlined_call_operand.vmem [shape: f32[24,32], index: 0, kind: input, shape index: {}]
  %s1 = inlined_call_operand.vmem [shape: s32[1,24], index: 1, kind: input, shape index: {}]
  %s2 = inlined_call_operand.vmem [shape: f32[32,128], index: 2, kind: input, shape index: {}]
  %s3 = inlined_call_operand.vmem [shape: f32[128,64], index: 3, kind: input, shape index: {}]
  %s4 = inlined_call_operand.vmem [shape: f32[1,64], index: 4, kind: input, shape index: {}]
  %s5 = inlined_call_operand.vmem [shape: f32[64,32], index: 5, kind: input, shape index: {}]
  %s6 = inlined_call_operand.vmem [shape: f32[1,32], index: 6, kind: input, shape index: {}]
  %s7 = inlined_call_operand.vmem [shape: f32[32,128], index: 7, kind: input, shape index: {}]
  %s8 = inlined_call_operand.vmem [shape: f32[1,128], index: 8, kind: input, shape index: {}]
  %s9 = inlined_call_operand.hbm [shape: f32[8,128], index: 9, kind: output, shape index: {}]
  %s10 = sld [smem:[#allocation0]]
  $region54: #{tpu_custom_call.1} parent=0
    _
  %s12 = ssub.s32 1, %s10
  %s13 = scalar_select 0, %s12, %s10
  $region1: #{tpu_custom_call.1} parent=0
    #allocation3 [shape = 'u8[4096]{0}', space=vmem, size = 0x1000, scoped, tag = 'output window, operand 0, single buffered']
    #allocation4 [shape = 's32[1]{0}', space=sflag, size = 0x4, scoped, tag = 'scoped memory for tpu_custom_call.1']
    %14 = vsyncpa [#allocation4], 0
    // Predicated region
    $region2: #{tpu_custom_call.1} parent=1 // pred_check
      _
    $region3: #{tpu_custom_call.1} parent=1 // pred_check_branch
      %16 = sbr.rel (0) target = $region5
    $region4: #{tpu_custom_call.1} parent=1 // pred_region
      _
    $region5: #{tpu_custom_call.1} parent=1 // pred_fallthru
      _
    // Predicated region
    $region6: #{tpu_custom_call.1} parent=1 // pred_check
      _
    $region7: #{tpu_custom_call.1} parent=1 // pred_check_branch
      %18 = sbr.rel (0) target = $region9
    $region8: #{tpu_custom_call.1} parent=1 // pred_region
      _
    $region9: #{tpu_custom_call.1} parent=1 // pred_fallthru
      _
    // Predicated region
    $region10: #{tpu_custom_call.1} parent=1 // pred_check
      _
    $region11: #{tpu_custom_call.1} parent=1 // pred_check_branch
      %20 = sbr.rel (0) target = $region13
    $region12: #{tpu_custom_call.1} parent=1 // pred_region
      _
    $region13: #{tpu_custom_call.1} parent=1 // pred_fallthru
      _
    // Predicated region
    $region14: #{tpu_custom_call.1} parent=1 // pred_check
      _
    $region15: #{tpu_custom_call.1} parent=1 // pred_check_branch
      %22 = sbr.rel (0) target = $region17
    $region16: #{tpu_custom_call.1} parent=1 // pred_region
      _
    $region17: #{tpu_custom_call.1} parent=1 // pred_fallthru
      _
    // Predicated region
    $region18: #{tpu_custom_call.1} parent=1 // pred_check
      _
    $region19: #{tpu_custom_call.1} parent=1 // pred_check_branch
      %24 = sbr.rel (0) target = $region21
    $region20: #{tpu_custom_call.1} parent=1 // pred_region
      _
    $region21: #{tpu_custom_call.1} parent=1 // pred_fallthru
      _
    // Predicated region
    $region22: #{tpu_custom_call.1} parent=1 // pred_check
      _
    $region23: #{tpu_custom_call.1} parent=1 // pred_check_branch
      %26 = sbr.rel (0) target = $region25
    $region24: #{tpu_custom_call.1} parent=1 // pred_region
      _
    $region25: #{tpu_custom_call.1} parent=1 // pred_fallthru
      _
    // Predicated region
    $region26: #{tpu_custom_call.1} parent=1 // pred_check
      _
    $region27: #{tpu_custom_call.1} parent=1 // pred_check_branch
      %28 = sbr.rel (0) target = $region29
    $region28: #{tpu_custom_call.1} parent=1 // pred_region
      _
    $region29: #{tpu_custom_call.1} parent=1 // pred_fallthru
      _
    // Predicated region
    $region30: #{tpu_custom_call.1} parent=1 // pred_check
      _
    $region31: #{tpu_custom_call.1} parent=1 // pred_check_branch
      %30 = sbr.rel (0) target = $region33
    $region32: #{tpu_custom_call.1} parent=1 // pred_region
      _
    $region33: #{tpu_custom_call.1} parent=1 // pred_fallthru
      _
    // Predicated region
    $region34: #{tpu_custom_call.1} parent=1 // pred_check
      _
    $region35: #{tpu_custom_call.1} parent=1 // pred_check_branch
      %32 = sbr.rel (0) target = $region37
    $region36: #{tpu_custom_call.1} parent=1 // pred_region
      _
    $region37: #{tpu_custom_call.1} parent=1 // pred_fallthru
      _
    %p33 = scmp.eq.s32.totalorder 0, 0
    // Predicated region
    $region38: #{tpu_custom_call.1} parent=1 // pred_check
      %p34 = pneg %p33
    $region39: #{tpu_custom_call.1} parent=1 // pred_check_branch
      %36 = sbr.rel (%p34) target = $region41
    $region40: #{tpu_custom_call.1} parent=1 // pred_region
      %37 = vst [vmem:[#allocation2] sm:$0xff] 0.0
    $region41: #{tpu_custom_call.1} parent=1 // pred_fallthru
      _
    %v38 = vld [vmem:[%s0] sm:$0xff]
    %v39 = vld [vmem:[%s0 + $0x8] sm:$0xff]
    %v40 = vld [vmem:[%s0 + $0x10] sm:$0xff]
    %v41 = vld [vmem:[%s2] sm:$0xff]
    %v42 = vld [vmem:[%s2 + $0x8] sm:$0xff]
    %v43 = vld [vmem:[%s2 + $0x10] sm:$0xff]
    %v44 = vld [vmem:[%s2 + $0x18] sm:$0xff]
    %vm45 = vcmask 261120
    %v47 = vsel %vm45, %v38, 0
    %v50 = vsel %vm45, %v39, 0
    %v53 = vsel %vm45, %v40, 0
    %55 = vmatprep.subr.mxu0 0.0
    %56 = vmatpush1.msra.mxu0 %v41
    %57 = vmatprep.subr.mxu0 0.0
    %58 = vmatpush1.msra.mxu0 %v42
    %59 = vmatprep.subr.mxu0 0.0
    %60 = vmatpush1.msra.mxu0 %v43
    %61 = vmatprep.subr.mxu0 0.0
    %62 = vmatpush1.msra.mxu0 %v44
    %63 = vmatprep.subr.mxu0 0.0
    %64 = vmatpush1.msra.mxu0 0.0
    %65 = vmatprep.subr.mxu0 0.0
    %66 = vmatpush1.msra.mxu0 0.0
    %67 = vmatprep.subr.mxu0 0.0
    %68 = vmatpush1.msra.mxu0 0.0
    %69 = vmatprep.subr.mxu0 0.0
    %70 = vmatpush1.msra.mxu0 0.0
    %71 = vmatprep.subr.mxu0 0.0
    %72 = vmatpush1.msra.mxu0 0.0
    %73 = vmatprep.subr.mxu0 0.0
    %74 = vmatpush1.msra.mxu0 0.0
    %75 = vmatprep.subr.mxu0 0.0
    %76 = vmatpush1.msra.mxu0 0.0
    %77 = vmatprep.subr.mxu0 0.0
    %78 = vmatpush1.msra.mxu0 0.0
    %79 = vmatprep.subr.mxu0 0.0
    %80 = vmatpush1.msra.mxu0 0.0
    %81 = vmatprep.subr.mxu0 0.0
    %82 = vmatpush1.msra.mxu0 0.0
    %83 = vmatprep.subr.mxu0 0.0
    %84 = vmatpush1.msra.mxu0 0.0
    %85 = vmatprep.subr.mxu0 0.0
    %86 = vmatpush1.msra.mxu0 0.0
    %87 = vmatprep.subr.mxu0 0.0
    %88 = vmatpush1.msra.mxu0 0.0
    %89 = vmatprep.subr.mxu0 0.0
    %90 = vmatpush1.msra.mxu0 0.0
    %91 = vmatprep.subr.mxu0 0.0
    %92 = vmatpush1.msra.mxu0 0.0
    %93 = vmatprep.subr.mxu0 0.0
    %94 = vmatpush1.msra.mxu0 0.0
    %95 = vmatprep.subr.mxu0 0.0
    %96 = vmatpush1.msra.mxu0 0.0
    %97 = vmatprep.subr.mxu0 0.0
    %98 = vmatpush1.msra.mxu0 0.0
    %99 = vmatprep.subr.mxu0 0.0
    %100 = vmatpush1.msra.mxu0 0.0
    %101 = vmatprep.subr.mxu0 0.0
    %102 = vmatpush1.msra.mxu0 0.0
    %103 = vmatprep.subr.mxu0 0.0
    %104 = vmatpush1.msra.mxu0 0.0
    %105 = vmatprep.subr.mxu0 0.0
    %106 = vmatpush1.msra.mxu0 0.0
    %107 = vmatprep.subr.mxu0 0.0
    %108 = vmatpush1.msra.mxu0 0.0
    %109 = vmatprep.subr.mxu0 0.0
    %110 = vmatpush1.msra.mxu0 0.0
    %111 = vmatprep.subr.mxu0 0.0
    %112 = vmatpush1.msra.mxu0 0.0
    %113 = vmatprep.subr.mxu0 0.0
    %114 = vmatpush1.msra.mxu0 0.0
    %115 = vmatprep.subr.mxu0 0.0
    %116 = vmatpush1.msra.mxu0 0.0
    %117 = vmatprep.subr.mxu0 0.0
    %118 = vmatpush1.msra.mxu0 0.0
    %119 = vmatprep.mubr.f32.mxu0 0.0
    %120 = vmatmul.mubr.f32.gmra.mrb[0].mxu0 %v47
    %v121 = vpop.f32.mrb[0].mxu0
    %v122 = vadd.f32 0.0, %v121
    %v123 = vpop.f32.mrb[0].mxu0
    %124 = vmatprep.mubr.f32.mxu0 0.0
    %125 = vmatmul.mubr.f32.gmra.mrb[0].mxu0 %v50
    %v126 = vpop.f32.mrb[0].mxu0
    %v127 = vadd.f32 0.0, %v126
    %v128 = vpop.f32.mrb[0].mxu0
    %129 = vmatprep.mubr.f32.mxu0 0.0
    %130 = vmatmul.mubr.f32.gmra.mrb[0].mxu0 %v53
    %v131 = vpop.f32.mrb[0].mxu0
    %v132 = vadd.f32 0.0, %v131
    %v133 = vpop.f32.mrb[0].mxu0
    %134 = vdwg.mxu0
    %v135 = vlaneseq
    %v136 = vshrl.u32 %v135, 7
    %v137 = vld [vmem:[%s1] sm:$0x1]
    %v138 = vlaneseq
    %v139 = vshrl.u32 %v138, 7
    %v140 = vsub.s32 0, %v139
    %v141 = vrot.slane %v137, %v140
    %vm142 = vcmp.eq.s32.totalorder %v136, %v141
    %v143 = vsel %vm142, 1, 0
    %v144 = vcvt.s32.f32 %v143
    %v145 = vld [vmem:[#allocation2] sm:$0xff]
    %vm146 = vcmask 195584
    %v148 = vsel %vm146, %v144, 0
    %150 = vmatprep.subr.mxu0 0.0
    %151 = vmatpush1.msra.mxu0 %v122
    %152 = vmatprep.subr.mxu0 0.0
    %153 = vmatpush1.msra.mxu0 %v127
    %154 = vmatprep.subr.mxu0 0.0
    %155 = vmatpush1.msra.mxu0 %v132
    %156 = vmatprep.subr.mxu0 0.0
    %157 = vmatpush1.msra.mxu0 0.0
    %158 = vmatprep.subr.mxu0 0.0
    %159 = vmatpush1.msra.mxu0 0.0
    %160 = vmatprep.subr.mxu0 0.0
    %161 = vmatpush1.msra.mxu0 0.0
    %162 = vmatprep.subr.mxu0 0.0
    %163 = vmatpush1.msra.mxu0 0.0
    %164 = vmatprep.subr.mxu0 0.0
    %165 = vmatpush1.msra.mxu0 0.0
    %166 = vmatprep.subr.mxu0 0.0
    %167 = vmatpush1.msra.mxu0 0.0
    %168 = vmatprep.subr.mxu0 0.0
    %169 = vmatpush1.msra.mxu0 0.0
    %170 = vmatprep.subr.mxu0 0.0
    %171 = vmatpush1.msra.mxu0 0.0
    %172 = vmatprep.subr.mxu0 0.0
    %173 = vmatpush1.msra.mxu0 0.0
    %174 = vmatprep.subr.mxu0 0.0
    %175 = vmatpush1.msra.mxu0 0.0
    %176 = vmatprep.subr.mxu0 0.0
    %177 = vmatpush1.msra.mxu0 0.0
    %178 = vmatprep.subr.mxu0 0.0
    %179 = vmatpush1.msra.mxu0 0.0
    %180 = vmatprep.subr.mxu0 0.0
    %181 = vmatpush1.msra.mxu0 0.0
    %182 = vmatprep.subr.mxu0 0.0
    %183 = vmatpush1.msra.mxu0 0.0
    %184 = vmatprep.subr.mxu0 0.0
    %185 = vmatpush1.msra.mxu0 0.0
    %186 = vmatprep.subr.mxu0 0.0
    %187 = vmatpush1.msra.mxu0 0.0
    %188 = vmatprep.subr.mxu0 0.0
    %189 = vmatpush1.msra.mxu0 0.0
    %190 = vmatprep.subr.mxu0 0.0
    %191 = vmatpush1.msra.mxu0 0.0
    %192 = vmatprep.subr.mxu0 0.0
    %193 = vmatpush1.msra.mxu0 0.0
    %194 = vmatprep.subr.mxu0 0.0
    %195 = vmatpush1.msra.mxu0 0.0
    %196 = vmatprep.subr.mxu0 0.0
    %197 = vmatpush1.msra.mxu0 0.0
    %198 = vmatprep.subr.mxu0 0.0
    %199 = vmatpush1.msra.mxu0 0.0
    %200 = vmatprep.subr.mxu0 0.0
    %201 = vmatpush1.msra.mxu0 0.0
    %202 = vmatprep.subr.mxu0 0.0
    %203 = vmatpush1.msra.mxu0 0.0
    %204 = vmatprep.subr.mxu0 0.0
    %205 = vmatpush1.msra.mxu0 0.0
    %206 = vmatprep.subr.mxu0 0.0
    %207 = vmatpush1.msra.mxu0 0.0
    %208 = vmatprep.subr.mxu0 0.0
    %209 = vmatpush1.msra.mxu0 0.0
    %210 = vmatprep.subr.mxu0 0.0
    %211 = vmatpush1.msra.mxu0 0.0
    %212 = vmatprep.subr.mxu0 0.0
    %213 = vmatpush1.msra.mxu0 0.0
    %214 = vmatprep.mubr.f32.mxu0 0.0
    %215 = vmatmul.mubr.f32.gmra.mrb[0].mxu0 %v148
    %v216 = vpop.f32.mrb[0].mxu0
    %v217 = vadd.f32 0.0, %v216
    %v218 = vpop.f32.mrb[0].mxu0
    %219 = vdwg.mxu0
    %v220 = vadd.f32 %v145, %v217
    %221 = vst [vmem:[#allocation2] sm:$0xff] %v220
    // Predicated region
    $region42: #{tpu_custom_call.1} parent=1 // pred_check
      %p222 = pneg %p33
    $region43: #{tpu_custom_call.1} parent=1 // pred_check_branch
      %224 = sbr.rel (%p222) target = $region45
    $region44: #{tpu_custom_call.1} parent=1 // pred_region
      %v225 = vld [vmem:[#allocation2] sm:$0xff]
      %v226 = vmax.f32 %v225, 1.0
      %v227 = vrcp.pop %v226
      %229 = vset.pattern.permute.xlu0 35
      %230 = vperm.xlu0 %229, %v227
      %v231 = vpop.permute.xlu0 %230
      %v233 = vmul.f32 %v225, %v231
      %v234 = vld [vmem:[%s3] sm:$0xff]
      %v235 = vld [vmem:[%s3 + $0x8] sm:$0xff]
      %v236 = vld [vmem:[%s3 + $0x10] sm:$0xff]
      %v237 = vld [vmem:[%s3 + $0x18] sm:$0xff]
      %v238 = vld [vmem:[%s3 + $0x20] sm:$0xff]
      %v239 = vld [vmem:[%s3 + $0x28] sm:$0xff]
      %v240 = vld [vmem:[%s3 + $0x30] sm:$0xff]
      %v241 = vld [vmem:[%s3 + $0x38] sm:$0xff]
      %v242 = vld [vmem:[%s3 + $0x40] sm:$0xff]
      %v243 = vld [vmem:[%s3 + $0x48] sm:$0xff]
      %v244 = vld [vmem:[%s3 + $0x50] sm:$0xff]
      %v245 = vld [vmem:[%s3 + $0x58] sm:$0xff]
      %v246 = vld [vmem:[%s3 + $0x60] sm:$0xff]
      %v247 = vld [vmem:[%s3 + $0x68] sm:$0xff]
      %v248 = vld [vmem:[%s3 + $0x70] sm:$0xff]
      %v249 = vld [vmem:[%s3 + $0x78] sm:$0xff]
      %v250 = vld [vmem:[%s4] sm:$0x1]
      %v252 = vlaneseq
      %v253 = vshrl.u32 %v252, 7
      %v254 = vsub.s32 0, %v253
      %v255 = vrot.slane %v250, %v254
      %257 = vmatprep.subr.mxu0 0.0
      %258 = vmatpush1.msra.mxu0 %v234
      %259 = vmatprep.subr.mxu0 0.0
      %260 = vmatpush1.msra.mxu0 %v235
      %261 = vmatprep.subr.mxu0 0.0
      %262 = vmatpush1.msra.mxu0 %v236
      %263 = vmatprep.subr.mxu0 0.0
      %264 = vmatpush1.msra.mxu0 %v237
      %265 = vmatprep.subr.mxu0 0.0
      %266 = vmatpush1.msra.mxu0 %v238
      %267 = vmatprep.subr.mxu0 0.0
      %268 = vmatpush1.msra.mxu0 %v239
      %269 = vmatprep.subr.mxu0 0.0
      %270 = vmatpush1.msra.mxu0 %v240
      %271 = vmatprep.subr.mxu0 0.0
      %272 = vmatpush1.msra.mxu0 %v241
      %273 = vmatprep.subr.mxu0 0.0
      %274 = vmatpush1.msra.mxu0 %v242
      %275 = vmatprep.subr.mxu0 0.0
      %276 = vmatpush1.msra.mxu0 %v243
      %277 = vmatprep.subr.mxu0 0.0
      %278 = vmatpush1.msra.mxu0 %v244
      %279 = vmatprep.subr.mxu0 0.0
      %280 = vmatpush1.msra.mxu0 %v245
      %281 = vmatprep.subr.mxu0 0.0
      %282 = vmatpush1.msra.mxu0 %v246
      %283 = vmatprep.subr.mxu0 0.0
      %284 = vmatpush1.msra.mxu0 %v247
      %285 = vmatprep.subr.mxu0 0.0
      %286 = vmatpush1.msra.mxu0 %v248
      %287 = vmatprep.subr.mxu0 0.0
      %288 = vmatpush1.msra.mxu0 %v249
      %289 = vmatprep.subr.mxu0 0.0
      %290 = vmatpush1.msra.mxu0 0.0
      %291 = vmatprep.subr.mxu0 0.0
      %292 = vmatpush1.msra.mxu0 0.0
      %293 = vmatprep.subr.mxu0 0.0
      %294 = vmatpush1.msra.mxu0 0.0
      %295 = vmatprep.subr.mxu0 0.0
      %296 = vmatpush1.msra.mxu0 0.0
      %297 = vmatprep.subr.mxu0 0.0
      %298 = vmatpush1.msra.mxu0 0.0
      %299 = vmatprep.subr.mxu0 0.0
      %300 = vmatpush1.msra.mxu0 0.0
      %301 = vmatprep.subr.mxu0 0.0
      %302 = vmatpush1.msra.mxu0 0.0
      %303 = vmatprep.subr.mxu0 0.0
      %304 = vmatpush1.msra.mxu0 0.0
      %305 = vmatprep.subr.mxu0 0.0
      %306 = vmatpush1.msra.mxu0 0.0
      %307 = vmatprep.subr.mxu0 0.0
      %308 = vmatpush1.msra.mxu0 0.0
      %309 = vmatprep.subr.mxu0 0.0
      %310 = vmatpush1.msra.mxu0 0.0
      %311 = vmatprep.subr.mxu0 0.0
      %312 = vmatpush1.msra.mxu0 0.0
      %313 = vmatprep.subr.mxu0 0.0
      %314 = vmatpush1.msra.mxu0 0.0
      %315 = vmatprep.subr.mxu0 0.0
      %316 = vmatpush1.msra.mxu0 0.0
      %317 = vmatprep.subr.mxu0 0.0
      %318 = vmatpush1.msra.mxu0 0.0
      %319 = vmatprep.subr.mxu0 0.0
      %320 = vmatpush1.msra.mxu0 0.0
      %321 = vmatprep.mubr.f32.mxu0 0.0
      %322 = vmatmul.mubr.f32.gmra.mrb[0].mxu0 %v233
      %v323 = vpop.f32.mrb[0].mxu0
      %v324 = vadd.f32 %v255, %v323
      %v325 = vpop.f32.mrb[0].mxu0
      %326 = vdwg.mxu0
      %v327 = vmax.f32 %v324, 0.0
      %v328 = vand.u32 2147483647, %v324
      %v329 = vsub.f32 0.0, %v328
      %v330 = vmul.f32 %v329, 1.442695
      %v331 = vpow.pop %v330
      %v332 = vadd.f32 %v331, 1.0
      %v333 = vlog2.pop %v332
      %v334 = vmul.f32 %v333, 0.6931472
      %v335 = vmul.f32 -0.5, %v331
      %v336 = vadd.f32 %v335, 1.0
      %v337 = vmul.f32 %v336, %v331
      %v338 = vand.u32 2147483647, %v331
      %vm339 = vcmp.lt.f32.partialorder %v338, 0.0004427343
      %v340 = vsel %vm339, %v337, %v334
      %v341 = vadd.f32 %v327, %v340
      %v342 = vsub.f32 %v341, 0.6931472
      %v343 = vld [vmem:[%s5] sm:$0xff]
      %v344 = vld [vmem:[%s5 + $0x8] sm:$0xff]
      %v345 = vld [vmem:[%s5 + $0x10] sm:$0xff]
      %v346 = vld [vmem:[%s5 + $0x18] sm:$0xff]
      %v347 = vld [vmem:[%s5 + $0x20] sm:$0xff]
      %v348 = vld [vmem:[%s5 + $0x28] sm:$0xff]
      %v349 = vld [vmem:[%s5 + $0x30] sm:$0xff]
      %v350 = vld [vmem:[%s5 + $0x38] sm:$0xff]
      %v351 = vld [vmem:[%s6] sm:$0x1]
      %v353 = vlaneseq
      %v354 = vshrl.u32 %v353, 7
      %v355 = vsub.s32 0, %v354
      %v356 = vrot.slane %v351, %v355
      %vm358 = vcmask 523264
      %v360 = vsel %vm358, %v342, 0
      %362 = vmatprep.subr.mxu0 0.0
      %363 = vmatpush1.msra.mxu0 %v343
      %364 = vmatprep.subr.mxu0 0.0
      %365 = vmatpush1.msra.mxu0 %v344
      %366 = vmatprep.subr.mxu0 0.0
      %367 = vmatpush1.msra.mxu0 %v345
      %368 = vmatprep.subr.mxu0 0.0
      %369 = vmatpush1.msra.mxu0 %v346
      %370 = vmatprep.subr.mxu0 0.0
      %371 = vmatpush1.msra.mxu0 %v347
      %372 = vmatprep.subr.mxu0 0.0
      %373 = vmatpush1.msra.mxu0 %v348
      %374 = vmatprep.subr.mxu0 0.0
      %375 = vmatpush1.msra.mxu0 %v349
      %376 = vmatprep.subr.mxu0 0.0
      %377 = vmatpush1.msra.mxu0 %v350
      %378 = vmatprep.subr.mxu0 0.0
      %379 = vmatpush1.msra.mxu0 0.0
      %380 = vmatprep.subr.mxu0 0.0
      %381 = vmatpush1.msra.mxu0 0.0
      %382 = vmatprep.subr.mxu0 0.0
      %383 = vmatpush1.msra.mxu0 0.0
      %384 = vmatprep.subr.mxu0 0.0
      %385 = vmatpush1.msra.mxu0 0.0
      %386 = vmatprep.subr.mxu0 0.0
      %387 = vmatpush1.msra.mxu0 0.0
      %388 = vmatprep.subr.mxu0 0.0
      %389 = vmatpush1.msra.mxu0 0.0
      %390 = vmatprep.subr.mxu0 0.0
      %391 = vmatpush1.msra.mxu0 0.0
      %392 = vmatprep.subr.mxu0 0.0
      %393 = vmatpush1.msra.mxu0 0.0
      %394 = vmatprep.subr.mxu0 0.0
      %395 = vmatpush1.msra.mxu0 0.0
      %396 = vmatprep.subr.mxu0 0.0
      %397 = vmatpush1.msra.mxu0 0.0
      %398 = vmatprep.subr.mxu0 0.0
      %399 = vmatpush1.msra.mxu0 0.0
      %400 = vmatprep.subr.mxu0 0.0
      %401 = vmatpush1.msra.mxu0 0.0
      %402 = vmatprep.subr.mxu0 0.0
      %403 = vmatpush1.msra.mxu0 0.0
      %404 = vmatprep.subr.mxu0 0.0
      %405 = vmatpush1.msra.mxu0 0.0
      %406 = vmatprep.subr.mxu0 0.0
      %407 = vmatpush1.msra.mxu0 0.0
      %408 = vmatprep.subr.mxu0 0.0
      %409 = vmatpush1.msra.mxu0 0.0
      %410 = vmatprep.subr.mxu0 0.0
      %411 = vmatpush1.msra.mxu0 0.0
      %412 = vmatprep.subr.mxu0 0.0
      %413 = vmatpush1.msra.mxu0 0.0
      %414 = vmatprep.subr.mxu0 0.0
      %415 = vmatpush1.msra.mxu0 0.0
      %416 = vmatprep.subr.mxu0 0.0
      %417 = vmatpush1.msra.mxu0 0.0
      %418 = vmatprep.subr.mxu0 0.0
      %419 = vmatpush1.msra.mxu0 0.0
      %420 = vmatprep.subr.mxu0 0.0
      %421 = vmatpush1.msra.mxu0 0.0
      %422 = vmatprep.subr.mxu0 0.0
      %423 = vmatpush1.msra.mxu0 0.0
      %424 = vmatprep.subr.mxu0 0.0
      %425 = vmatpush1.msra.mxu0 0.0
      %426 = vmatprep.mubr.f32.mxu0 0.0
      %427 = vmatmul.mubr.f32.gmra.mrb[0].mxu0 %v360
      %v428 = vpop.f32.mrb[0].mxu0
      %v429 = vadd.f32 %v356, %v428
      %v430 = vpop.f32.mrb[0].mxu0
      %431 = vdwg.mxu0
      %v432 = vmax.f32 %v429, 0.0
      %v433 = vand.u32 2147483647, %v429
      %v434 = vsub.f32 0.0, %v433
      %v435 = vmul.f32 %v434, 1.442695
      %v436 = vpow.pop %v435
      %v437 = vadd.f32 %v436, 1.0
      %v438 = vlog2.pop %v437
      %v439 = vmul.f32 %v438, 0.6931472
      %v440 = vmul.f32 -0.5, %v436
      %v441 = vadd.f32 %v440, 1.0
      %v442 = vmul.f32 %v441, %v436
      %v443 = vand.u32 2147483647, %v436
      %vm444 = vcmp.lt.f32.partialorder %v443, 0.0004427343
      %v445 = vsel %vm444, %v442, %v439
      %v446 = vadd.f32 %v432, %v445
      %v447 = vsub.f32 %v446, 0.6931472
      %v448 = vld [vmem:[%s7] sm:$0xff]
      %v449 = vld [vmem:[%s7 + $0x8] sm:$0xff]
      %v450 = vld [vmem:[%s7 + $0x10] sm:$0xff]
      %v451 = vld [vmem:[%s7 + $0x18] sm:$0xff]
      %v452 = vld [vmem:[%s8] sm:$0x1]
      %v454 = vlaneseq
      %v455 = vshrl.u32 %v454, 7
      %v456 = vsub.s32 0, %v455
      %v457 = vrot.slane %v452, %v456
      %v460 = vsel %vm45, %v447, 0
      %462 = vmatprep.subr.mxu0 0.0
      %463 = vmatpush1.msra.mxu0 %v448
      %464 = vmatprep.subr.mxu0 0.0
      %465 = vmatpush1.msra.mxu0 %v449
      %466 = vmatprep.subr.mxu0 0.0
      %467 = vmatpush1.msra.mxu0 %v450
      %468 = vmatprep.subr.mxu0 0.0
      %469 = vmatpush1.msra.mxu0 %v451
      %470 = vmatprep.subr.mxu0 0.0
      %471 = vmatpush1.msra.mxu0 0.0
      %472 = vmatprep.subr.mxu0 0.0
      %473 = vmatpush1.msra.mxu0 0.0
      %474 = vmatprep.subr.mxu0 0.0
      %475 = vmatpush1.msra.mxu0 0.0
      %476 = vmatprep.subr.mxu0 0.0
      %477 = vmatpush1.msra.mxu0 0.0
      %478 = vmatprep.subr.mxu0 0.0
      %479 = vmatpush1.msra.mxu0 0.0
      %480 = vmatprep.subr.mxu0 0.0
      %481 = vmatpush1.msra.mxu0 0.0
      %482 = vmatprep.subr.mxu0 0.0
      %483 = vmatpush1.msra.mxu0 0.0
      %484 = vmatprep.subr.mxu0 0.0
      %485 = vmatpush1.msra.mxu0 0.0
      %486 = vmatprep.subr.mxu0 0.0
      %487 = vmatpush1.msra.mxu0 0.0
      %488 = vmatprep.subr.mxu0 0.0
      %489 = vmatpush1.msra.mxu0 0.0
      %490 = vmatprep.subr.mxu0 0.0
      %491 = vmatpush1.msra.mxu0 0.0
      %492 = vmatprep.subr.mxu0 0.0
      %493 = vmatpush1.msra.mxu0 0.0
      %494 = vmatprep.subr.mxu0 0.0
      %495 = vmatpush1.msra.mxu0 0.0
      %496 = vmatprep.subr.mxu0 0.0
      %497 = vmatpush1.msra.mxu0 0.0
      %498 = vmatprep.subr.mxu0 0.0
      %499 = vmatpush1.msra.mxu0 0.0
      %500 = vmatprep.subr.mxu0 0.0
      %501 = vmatpush1.msra.mxu0 0.0
      %502 = vmatprep.subr.mxu0 0.0
      %503 = vmatpush1.msra.mxu0 0.0
      %504 = vmatprep.subr.mxu0 0.0
      %505 = vmatpush1.msra.mxu0 0.0
      %506 = vmatprep.subr.mxu0 0.0
      %507 = vmatpush1.msra.mxu0 0.0
      %508 = vmatprep.subr.mxu0 0.0
      %509 = vmatpush1.msra.mxu0 0.0
      %510 = vmatprep.subr.mxu0 0.0
      %511 = vmatpush1.msra.mxu0 0.0
      %512 = vmatprep.subr.mxu0 0.0
      %513 = vmatpush1.msra.mxu0 0.0
      %514 = vmatprep.subr.mxu0 0.0
      %515 = vmatpush1.msra.mxu0 0.0
      %516 = vmatprep.subr.mxu0 0.0
      %517 = vmatpush1.msra.mxu0 0.0
      %518 = vmatprep.subr.mxu0 0.0
      %519 = vmatpush1.msra.mxu0 0.0
      %520 = vmatprep.subr.mxu0 0.0
      %521 = vmatpush1.msra.mxu0 0.0
      %522 = vmatprep.subr.mxu0 0.0
      %523 = vmatpush1.msra.mxu0 0.0
      %524 = vmatprep.subr.mxu0 0.0
      %525 = vmatpush1.msra.mxu0 0.0
      %526 = vmatprep.mubr.f32.mxu0 0.0
      %527 = vmatmul.mubr.f32.gmra.mrb[0].mxu0 %v460
      %v528 = vpop.f32.mrb[0].mxu0
      %v529 = vadd.f32 %v457, %v528
      %v530 = vpop.f32.mrb[0].mxu0
      %531 = vdwg.mxu0
      %532 = vst [vmem:[#allocation3] sm:$0xff] %v529
    $region45: #{tpu_custom_call.1} parent=1 // pred_fallthru
      _
    // Predicated region
    $region46: #{tpu_custom_call.1} parent=1 // pred_check
      _
    $region47: #{tpu_custom_call.1} parent=1 // pred_check_branch
      %534 = sbr.rel (0) target = $region49
    $region48: #{tpu_custom_call.1} parent=1 // pred_region
      %s536 = ssub.s32 128, 128
      %537 = vsyncadd [#allocation4], %s536
      %s539 = sshll.u32 [#allocation3], 4
      %s540 = int_to_ptr.vmem [resolvable:$true] %s539
      %542 = dma.vmem_to_hbm [thread:$0]  %s540, 128, %s9, [#allocation4]
    $region49: #{tpu_custom_call.1} parent=1 // pred_fallthru
      _
    // Predicated region
    $region50: #{tpu_custom_call.1} parent=1 // pred_check
      _
    $region51: #{tpu_custom_call.1} parent=1 // pred_check_branch
      %544 = sbr.rel (0) target = $region53
    $region52: #{tpu_custom_call.1} parent=1 // pred_region
      %545 = dma.done [#allocation4], 128
    $region53: #{tpu_custom_call.1} parent=1 // pred_fallthru
      _
    %546 = vsyncpa [#allocation4], 1

</llo_original>
